<compile_context>
chip_gen: v6e
topology: v6e:2x2x1
jax: 0.10.0
libtpu: 0.0.40
codegen_flags: <defaults>
</compile_context>

<pallas_src>
import functools

import jax
import jax.numpy as jnp
from jax import lax
from jax.experimental import pallas as pl
from jax.experimental.pallas import tpu as pltpu


def _round_up(x, m):
    return ((x + m - 1) // m) * m


def classifier_kernel(pooled_ref, wt_ref, b_ref, labels_ref,
                      logits_ref, loss_ref, *, batch_size, mask_tail):
    """One batch tile.

    pooled_ref : [TB, H]      activations (any float dtype)
    wt_ref     : [H, Lp]      classifier weight, pre-transposed + lane-padded
    b_ref      : [1, Lp]      f32 bias, padded columns = -1e9
    labels_ref : [TB, 1]      int32 labels (padded rows arbitrary)
    logits_ref : [TB, Lp]     padded f32 logits out
    loss_ref   : [TB, 1]      per-row CE loss out (0 for padded rows)
    """
    tb = pooled_ref.shape[0]
    lp = wt_ref.shape[1]

    # Dropout in eval mode is the identity.
    x = pooled_ref[...]                                               # [TB, H]

    # Linear head on the MXU (lane-dense Lp output tile, f32 accumulation).
    logits = jnp.dot(x, wt_ref[...],
                     preferred_element_type=jnp.float32) + b_ref[...]  # [TB, Lp]
    logits_ref[...] = logits

    # Cross entropy per row: lse(logits) - logits[label].
    m = jnp.max(logits, axis=-1, keepdims=True)                       # [TB, 1]
    lse = m + jnp.log(jnp.sum(jnp.exp(logits - m), axis=-1,
                              keepdims=True))                         # [TB, 1]
    onehot = (labels_ref[...] ==
              lax.broadcasted_iota(jnp.int32, (tb, lp), 1)).astype(jnp.float32)
    gold = jnp.sum(logits * onehot, axis=-1, keepdims=True)           # [TB, 1]
    per_row = lse - gold                                              # [TB, 1]

    if mask_tail:
        # Only emitted when the batch was padded: zero the padded rows.
        row = pl.program_id(0) * tb + lax.broadcasted_iota(jnp.int32, (tb, 1), 0)
        per_row = jnp.where(row < batch_size, per_row, 0.0)
    loss_ref[...] = per_row


def linear_classifier_forward(hidden_states, weight, bias, labels, *, tile_b=None):
    """hidden_states: [B, S, H] float, weight: [L, H] (PyTorch layout),
    bias: [L], labels: [B] int.  Returns (loss scalar, logits [B, L])."""
    B, S, H = hidden_states.shape
    L = weight.shape[0]

    # CLS pooling in the wrapper: the kernel never sees the sequence axis.
    pooled = hidden_states[:, 0, :]                                   # [B, H]
    act_dtype = pooled.dtype

    # Batch tiling (multiple of 8 rows, no cross-tile carry).
    if tile_b is None:
        tile_b = min(256, _round_up(B, 8))
    tile_b = max(8, _round_up(tile_b, 8))
    num_tiles = -(-B // tile_b)
    B_pad = num_tiles * tile_b

    # Lane-dense logits: pad num_labels up to a multiple of 128.
    L_pad = _round_up(max(L, 128), 128)

    w_t = jnp.pad(jnp.transpose(weight).astype(act_dtype),
                  ((0, 0), (0, L_pad - L)))                           # [H, L_pad]
    b2 = jnp.pad(bias.reshape(1, L).astype(jnp.float32),
                 ((0, 0), (0, L_pad - L)), constant_values=-1e9)      # [1, L_pad]
    pooled_p = jnp.pad(pooled, ((0, B_pad - B), (0, 0)))              # [B_pad, H]
    labels_p = jnp.pad(labels.astype(jnp.int32),
                       (0, B_pad - B)).reshape(B_pad, 1)              # [B_pad, 1]

    kernel = functools.partial(classifier_kernel, batch_size=B,
                               mask_tail=(B_pad != B))

    act_bytes = jnp.dtype(act_dtype).itemsize
    cost = pl.CostEstimate(
        flops=2 * B_pad * H * L_pad + 6 * B_pad * L_pad,
        transcendentals=B_pad * L_pad,
        bytes_accessed=(B_pad * H * act_bytes + H * L_pad * act_bytes
                        + L_pad * 4 + B_pad * 4
                        + B_pad * L_pad * 4 + B_pad * 4),
    )

    logits_p, loss_rows = pl.pallas_call(
        kernel,
        out_shape=(
            jax.ShapeDtypeStruct((B_pad, L_pad), jnp.float32),
            jax.ShapeDtypeStruct((B_pad, 1), jnp.float32),
        ),
        grid=(num_tiles,),
        in_specs=[
            pl.BlockSpec((tile_b, H), lambda i: (i, 0)),       # activations stream
            pl.BlockSpec((H, L_pad), lambda i: (0, 0)),        # weight: resident
            pl.BlockSpec((1, L_pad), lambda i: (0, 0)),        # bias: resident
            pl.BlockSpec((tile_b, 1), lambda i: (i, 0)),       # labels
        ],
        out_specs=(
            pl.BlockSpec((tile_b, L_pad), lambda i: (i, 0)),   # padded logits
            pl.BlockSpec((tile_b, 1), lambda i: (i, 0)),       # per-row loss
        ),
        compiler_params=pltpu.CompilerParams(
            dimension_semantics=("parallel",)),
        cost_estimate=cost,
    )(pooled_p, w_t, b2, labels_p)

    # Finish the mean outside (padded rows already contribute 0).
    loss = jnp.sum(loss_rows) / B
    logits = logits_p[:B, :L]
    return loss, logits


if __name__ == "__main__":
    # Small synthetic config: batch=18 (non-multiple of tile to exercise the
    # tail mask), seq=8, hidden=128, num_labels=3 (NLI).
    B, S, H, L = 18, 8, 128, 3

    key = jax.random.PRNGKey(0)
    k_hid, k_w, k_b, k_lab = jax.random.split(key, 4)

    hidden_states = jax.random.normal(k_hid, (B, S, H), dtype=jnp.float32)
    weight = jax.random.normal(k_w, (L, H), dtype=jnp.float32) * (1.0 / jnp.sqrt(H))
    bias = jax.random.normal(k_b, (L,), dtype=jnp.float32) * 0.01
    labels = jax.random.randint(k_lab, (B,), 0, L, dtype=jnp.int32)

    fwd = jax.jit(functools.partial(linear_classifier_forward, tile_b=8))
    loss, logits = fwd(hidden_states, weight, bias, labels)
    jax.block_until_ready((loss, logits))

    # Reference check in plain JAX.
    pooled_ref = hidden_states[:, 0]
    logits_ref = pooled_ref @ weight.T + bias
    lse_ref = jax.scipy.special.logsumexp(logits_ref, axis=-1)
    loss_ref = jnp.mean(lse_ref - logits_ref[jnp.arange(B), labels])
    assert jnp.allclose(logits, logits_ref, atol=1e-4), "logits mismatch"
    assert jnp.allclose(loss, loss_ref, atol=1e-4), "loss mismatch"

    print("KERNEL_OK")
</pallas_src>

<mosaic_0001>
module attributes {stable_mosaic.version = 11 : i64} {
  func.func @classifier_kernel(%arg0: i32, %arg1: memref<8x128xf32, #tpu.memory_space<vmem>>, %arg2: memref<128x128xf32, #tpu.memory_space<vmem>>, %arg3: memref<1x128xf32, #tpu.memory_space<vmem>>, %arg4: memref<8x1xi32, #tpu.memory_space<vmem>>, %arg5: memref<8x128xf32, #tpu.memory_space<vmem>>, %arg6: memref<8x1xf32, #tpu.memory_space<vmem>>) attributes {dimension_semantics = [#tpu.dimension_semantics<parallel>], iteration_bounds = array<i64: 3>, scalar_prefetch = 0 : i64, scratch_operands = 0 : i64, tpu.core_type = #tpu.core_type<tc>, window_params = [{transform_indices = @transform_0, window_bounds = array<i64: 8, 128>}, {pipeline_mode = #tpu.pipeline_mode<synchronous>, transform_indices = @transform_1, window_bounds = array<i64: 128, 128>}, {pipeline_mode = #tpu.pipeline_mode<synchronous>, transform_indices = @transform_2, window_bounds = array<i64: 1, 128>}, {transform_indices = @transform_3, window_bounds = array<i64: 8, 1>}, {transform_indices = @transform_4, window_bounds = array<i64: 8, 128>}, {transform_indices = @transform_5, window_bounds = array<i64: 8, 1>}]} {
    %c0 = arith.constant 0 : index
    %c0_0 = arith.constant 0 : index
    %0 = vector.load %arg1[%c0, %c0_0] : memref<8x128xf32, #tpu.memory_space<vmem>>, vector<8x128xf32>
    %c0_1 = arith.constant 0 : index
    %c0_2 = arith.constant 0 : index
    %1 = vector.load %arg2[%c0_1, %c0_2] : memref<128x128xf32, #tpu.memory_space<vmem>>, vector<128x128xf32>
    %cst = arith.constant dense<0.000000e+00> : vector<8x128xf32>
    %2 = tpu.matmul %0, %1, %cst {dimension_numbers = #tpu.dot_dimension_numbers<[1], [0], [0], [1], [0, 0, 1, 1], [], []>} : vector<8x128xf32>, vector<128x128xf32>, vector<8x128xf32> -> vector<8x128xf32>
    %c0_3 = arith.constant 0 : index
    %c0_4 = arith.constant 0 : index
    %3 = vector.load %arg3[%c0_3, %c0_4] : memref<1x128xf32, #tpu.memory_space<vmem>>, vector<1x128xf32>
    %4 = vector.broadcast %3 : vector<1x128xf32> to vector<8x128xf32>
    %5 = arith.addf %2, %4 : vector<8x128xf32>
    %c0_5 = arith.constant 0 : index
    %c0_6 = arith.constant 0 : index
    %6 = vector.load %arg5[%c0_5, %c0_6] : memref<8x128xf32, #tpu.memory_space<vmem>>, vector<8x128xf32>
    tpu.vector_store %arg5[%c0_5, %c0_6], %5 {strides = array<i32>} : memref<8x128xf32, #tpu.memory_space<vmem>>, vector<8x128xf32>,
    %cst_7 = arith.constant dense<0xFF800000> : vector<8xf32>
    %7 = vector.multi_reduction <maximumf>, %5, %cst_7 [1] : vector<8x128xf32> to vector<8xf32>
    %8 = vector.shape_cast %7 : vector<8xf32> to vector<8x1xf32>
    %9 = vector.broadcast %8 : vector<8x1xf32> to vector<8x128xf32>
    %10 = arith.subf %5, %9 : vector<8x128xf32>
    %11 = math.exp %10 : vector<8x128xf32>
    %cst_8 = arith.constant dense<0.000000e+00> : vector<8xf32>
    %12 = vector.multi_reduction <add>, %11, %cst_8 [1] : vector<8x128xf32> to vector<8xf32>
    %13 = vector.shape_cast %12 : vector<8xf32> to vector<8x1xf32>
    %14 = math.log %13 : vector<8x1xf32>
    %15 = arith.addf %8, %14 : vector<8x1xf32>
    %c0_9 = arith.constant 0 : index
    %c0_10 = arith.constant 0 : index
    %16 = vector.load %arg4[%c0_9, %c0_10] : memref<8x1xi32, #tpu.memory_space<vmem>>, vector<8x1xi32>
    %17 = tpu.iota {dimensions = array<i32: 1>} : vector<8x128xi32>
    %18 = vector.broadcast %16 : vector<8x1xi32> to vector<8x128xi32>
    %19 = arith.cmpi eq, %18, %17 : vector<8x128xi32>
    %20 = arith.extui %19 : vector<8x128xi1> to vector<8x128xi32>
    %21 = arith.sitofp %20 : vector<8x128xi32> to vector<8x128xf32>
    %22 = arith.mulf %5, %21 : vector<8x128xf32>
    %cst_11 = arith.constant dense<0.000000e+00> : vector<8xf32>
    %23 = vector.multi_reduction <add>, %22, %cst_11 [1] : vector<8x128xf32> to vector<8xf32>
    %24 = vector.shape_cast %23 : vector<8xf32> to vector<8x1xf32>
    %25 = arith.subf %15, %24 : vector<8x1xf32>
    %c8_i32 = arith.constant 8 : i32
    %26 = arith.muli %arg0, %c8_i32 : i32
    %27 = tpu.iota {dimensions = array<i32: 0>} : vector<8x1xi32>
    %28 = vector.broadcast %26 : i32 to vector<8x1xi32>
    %29 = arith.addi %28, %27 : vector<8x1xi32>
    %c18_i32 = arith.constant 18 : i32
    %30 = vector.broadcast %c18_i32 : i32 to vector<8x1xi32>
    %31 = arith.cmpi slt, %29, %30 : vector<8x1xi32>
    %cst_12 = arith.constant 0.000000e+00 : f32
    %32 = vector.broadcast %cst_12 : f32 to vector<8x1xf32>
    %33 = arith.select %31, %25, %32 : vector<8x1xi1>, vector<8x1xf32>
    %c0_13 = arith.constant 0 : index
    %c0_14 = arith.constant 0 : index
    %34 = vector.load %arg6[%c0_13, %c0_14] : memref<8x1xf32, #tpu.memory_space<vmem>>, vector<8x1xf32>
    tpu.vector_store %arg6[%c0_13, %c0_14], %33 {strides = array<i32>} : memref<8x1xf32, #tpu.memory_space<vmem>>, vector<8x1xf32>,
    return
  }
  func.func @transform_0(%arg0: i32) -> (i32, i32) {
    %c0_i32 = arith.constant 0 : i32
    %c0_i32_0 = arith.constant 0 : i32
    return %arg0, %c0_i32 : i32, i32
  }
  func.func @transform_1(%arg0: i32) -> (i32, i32) {
    %c0_i32 = arith.constant 0 : i32
    %c0_i32_0 = arith.constant 0 : i32
    %c0_i32_1 = arith.constant 0 : i32
    return %c0_i32, %c0_i32_0 : i32, i32
  }
  func.func @transform_2(%arg0: i32) -> (i32, i32) {
    %c0_i32 = arith.constant 0 : i32
    %c0_i32_0 = arith.constant 0 : i32
    %c0_i32_1 = arith.constant 0 : i32
    return %c0_i32, %c0_i32_0 : i32, i32
  }
  func.func @transform_3(%arg0: i32) -> (i32, i32) {
    %c0_i32 = arith.constant 0 : i32
    %c0_i32_0 = arith.constant 0 : i32
    return %arg0, %c0_i32 : i32, i32
  }
  func.func @transform_4(%arg0: i32) -> (i32, i32) {
    %c0_i32 = arith.constant 0 : i32
    %c0_i32_0 = arith.constant 0 : i32
    return %arg0, %c0_i32 : i32, i32
  }
  func.func @transform_5(%arg0: i32) -> (i32, i32) {
    %c0_i32 = arith.constant 0 : i32
    %c0_i32_0 = arith.constant 0 : i32
    return %arg0, %c0_i32 : i32, i32
  }
}

</mosaic_0001>

<llo_original>
// kernel: linear_classifier_forward.1
$region0: #{linear_classifier_forward.1}
  #allocation0 [shape = 'u32[]', space=smem, size = 0x4, offset = 0x4, fixed_abs, tag = 'smem constant byte address 0x4 - core index']
  #allocation1 [shape = 'u32[144,128]{1,0:T(1,128)}', space=vmem, size = 0x12000, scoped, tag = 'internal scratch']
  %s0 = inlined_call_operand.vmem [shape: f32[24,128], index: 0, kind: input, shape index: {}]
  %s1 = inlined_call_operand.vmem [shape: f32[128,128], index: 1, kind: input, shape index: {}]
  %s2 = inlined_call_operand.vmem [shape: f32[1,128], index: 2, kind: input, shape index: {}]
  %s3 = inlined_call_operand.vmem [shape: s32[24,1], index: 3, kind: input, shape index: {}]
  %s4 = inlined_call_operand.vmem [shape: f32[24,128], index: 4, kind: output, shape index: {0}]
  %s5 = inlined_call_operand.vmem [shape: f32[24,1], index: 5, kind: output, shape index: {1}]
  %6 = xla_tuple %s4, %s5
  %s7 = sld [smem:[#allocation0]]
  $region57: #{linear_classifier_forward.1} parent=0
    _
  %s9 = ssub.s32 1, %s7
  %s10 = scalar_select 0, %s9, %s7
  loop: start=0, step=1, limit=5
  $region2: #{linear_classifier_forward.1} parent=0 // loop_pre_header
    _
  $region3: #{linear_classifier_forward.1} parent=0 // loop_header
    %s12 = sphi 0, %s16
    %p13 = scmp.ge.s32.totalorder %s12, 5
    %s22 = sphi 0, %s24
    %s25 = sphi 0, %s22
    %s26 = sphi 0, %s25
    %s42 = sphi 0, %s26
    %s46 = sphi 0, %s46
    %s48 = sphi 0, %s46
    %s49 = sphi 0, %s48
    %s63 = sphi 0, %s49
    %s67 = sphi 0, %s67
    %s69 = sphi 0, %s67
    %s70 = sphi 0, %s69
    %s84 = sphi 0, %s70
    %s90 = sphi 0, %s92
    %s93 = sphi 0, %s90
    %s94 = sphi 0, %s93
    %s110 = sphi 0, %s94
    %s116 = sphi 0, %s118
    %s119 = sphi 0, %s116
    %s120 = sphi 0, %s119
    %s136 = sphi 0, %s120
    %s142 = sphi 0, %s144
    %s145 = sphi 0, %s142
    %s146 = sphi 0, %s145
    %s162 = sphi 0, %s146
  $region4: #{linear_classifier_forward.1} parent=0 // loop_header_branch
    %15 = sbr.rel (%p13) target = $region8
  $region5: #{linear_classifier_forward.1} parent=0 // loop_body
    %s17 = ssub.s32 %s12, 1
    %s18 = ssub.s32 %s12, 2
    %s19 = sadd.s32 %s12, 1
    %s20 = ssub.s32 %s12, %s19
    %p21 = scmp.eq.s32.totalorder %s20, 0
    %s23 = sadd.s32 %s22, 1
    %s24 = scalar_select %p21, %s22, %s23
    %p27 = pneg %p21
    %p28 = scmp.eq.s32.totalorder %s12, 2
    %p29 = por %p27, %p28
    %p30 = scmp.ne.s32.totalorder %s22, %s25
    %p31 = scmp.eq.s32.totalorder %s12, 0
    %p32 = por %p30, %p31
    %p33 = scmp.ne.s32.totalorder %s22, %s25
    %p34 = scmp.eq.s32.totalorder %s17, 2
    %p35 = por %p33, %p34
    %p36 = scmp.ne.s32.totalorder %s25, %s26
    %p37 = scmp.eq.s32.totalorder %s17, 0
    %p38 = por %p36, %p37
    %p39 = scmp.ne.s32.totalorder %s25, %s26
    %p40 = scmp.eq.s32.totalorder %s18, 2
    %p41 = por %p39, %p40
    %p43 = scmp.ne.s32.totalorder %s26, %s42
    %p44 = scmp.eq.s32.totalorder %s18, 0
    %p45 = por %p43, %p44
    %s47 = sadd.s32 %s46, 1
    %p50 = scmp.eq.s32.totalorder %s12, 2
    %p51 = scmp.ne.s32.totalorder %s46, %s48
    %p52 = scmp.eq.s32.totalorder %s12, 0
    %p53 = por %p51, %p52
    %p54 = scmp.ne.s32.totalorder %s46, %s48
    %p55 = scmp.eq.s32.totalorder %s17, 2
    %p56 = por %p54, %p55
    %p57 = scmp.ne.s32.totalorder %s48, %s49
    %p58 = scmp.eq.s32.totalorder %s17, 0
    %p59 = por %p57, %p58
    %p60 = scmp.ne.s32.totalorder %s48, %s49
    %p61 = scmp.eq.s32.totalorder %s18, 2
    %p62 = por %p60, %p61
    %p64 = scmp.ne.s32.totalorder %s49, %s63
    %p65 = scmp.eq.s32.totalorder %s18, 0
    %p66 = por %p64, %p65
    %s68 = sadd.s32 %s67, 1
    %p71 = scmp.eq.s32.totalorder %s12, 2
    %p72 = scmp.ne.s32.totalorder %s67, %s69
    %p73 = scmp.eq.s32.totalorder %s12, 0
    %p74 = por %p72, %p73
    %p75 = scmp.ne.s32.totalorder %s67, %s69
    %p76 = scmp.eq.s32.totalorder %s17, 2
    %p77 = por %p75, %p76
    %p78 = scmp.ne.s32.totalorder %s69, %s70
    %p79 = scmp.eq.s32.totalorder %s17, 0
    %p80 = por %p78, %p79
    %p81 = scmp.ne.s32.totalorder %s69, %s70
    %p82 = scmp.eq.s32.totalorder %s18, 2
    %p83 = por %p81, %p82
    %p85 = scmp.ne.s32.totalorder %s70, %s84
    %p86 = scmp.eq.s32.totalorder %s18, 0
    %p87 = por %p85, %p86
    %s88 = ssub.s32 %s12, %s19
    %p89 = scmp.eq.s32.totalorder %s88, 0
    %s91 = sadd.s32 %s90, 1
    %s92 = scalar_select %p89, %s90, %s91
    %p95 = pneg %p89
    %p96 = scmp.eq.s32.totalorder %s12, 2
    %p97 = por %p95, %p96
    %p98 = scmp.ne.s32.totalorder %s90, %s93
    %p99 = scmp.eq.s32.totalorder %s12, 0
    %p100 = por %p98, %p99
    %p101 = scmp.ne.s32.totalorder %s90, %s93
    %p102 = scmp.eq.s32.totalorder %s17, 2
    %p103 = por %p101, %p102
    %p104 = scmp.ne.s32.totalorder %s93, %s94
    %p105 = scmp.eq.s32.totalorder %s17, 0
    %p106 = por %p104, %p105
    %p107 = scmp.ne.s32.totalorder %s93, %s94
    %p108 = scmp.eq.s32.totalorder %s18, 2
    %p109 = por %p107, %p108
    %p111 = scmp.ne.s32.totalorder %s94, %s110
    %p112 = scmp.eq.s32.totalorder %s18, 0
    %p113 = por %p111, %p112
    %s114 = ssub.s32 %s12, %s19
    %p115 = scmp.eq.s32.totalorder %s114, 0
    %s117 = sadd.s32 %s116, 1
    %s118 = scalar_select %p115, %s116, %s117
    %p121 = pneg %p115
    %p122 = scmp.eq.s32.totalorder %s12, 2
    %p123 = por %p121, %p122
    %p124 = scmp.ne.s32.totalorder %s116, %s119
    %p125 = scmp.eq.s32.totalorder %s12, 0
    %p126 = por %p124, %p125
    %p127 = scmp.ne.s32.totalorder %s116, %s119
    %p128 = scmp.eq.s32.totalorder %s17, 2
    %p129 = por %p127, %p128
    %p130 = scmp.ne.s32.totalorder %s119, %s120
    %p131 = scmp.eq.s32.totalorder %s17, 0
    %p132 = por %p130, %p131
    %p133 = scmp.ne.s32.totalorder %s119, %s120
    %p134 = scmp.eq.s32.totalorder %s18, 2
    %p135 = por %p133, %p134
    %p137 = scmp.ne.s32.totalorder %s120, %s136
    %p138 = scmp.eq.s32.totalorder %s18, 0
    %p139 = por %p137, %p138
    %s140 = ssub.s32 %s12, %s19
    %p141 = scmp.eq.s32.totalorder %s140, 0
    %s143 = sadd.s32 %s142, 1
    %s144 = scalar_select %p141, %s142, %s143
    %p147 = pneg %p141
    %p148 = scmp.eq.s32.totalorder %s12, 2
    %p149 = por %p147, %p148
    %p150 = scmp.ne.s32.totalorder %s142, %s145
    %p151 = scmp.eq.s32.totalorder %s12, 0
    %p152 = por %p150, %p151
    %p153 = scmp.ne.s32.totalorder %s142, %s145
    %p154 = scmp.eq.s32.totalorder %s17, 2
    %p155 = por %p153, %p154
    %p156 = scmp.ne.s32.totalorder %s145, %s146
    %p157 = scmp.eq.s32.totalorder %s17, 0
    %p158 = por %p156, %p157
    %p159 = scmp.ne.s32.totalorder %s145, %s146
    %p160 = scmp.eq.s32.totalorder %s18, 2
    %p161 = por %p159, %p160
    %p163 = scmp.ne.s32.totalorder %s146, %s162
    %p164 = scmp.eq.s32.totalorder %s18, 0
    %p165 = por %p163, %p164
    %p166 = scmp.le.s32.totalorder 1, %s12
    %p167 = scmp.lt.s32.totalorder %s12, 4
    %p168 = pnand %p166, %p167
    %p169 = pneg %p168
    // Predicated region
    $region9: #{linear_classifier_forward.1} parent=5 // pred_check
      _
    $region10: #{linear_classifier_forward.1} parent=5 // pred_check_branch
      %171 = sbr.rel (%p168) target = $region12
    $region11: #{linear_classifier_forward.1} parent=5 // pred_region
      %s172 = ssub.s32 %s12, 1
      // Predicated region
      $region13: #{linear_classifier_forward.1} parent=11 // pred_check
        %p173 = pneg %p59
      $region14: #{linear_classifier_forward.1} parent=11 // pred_check_branch
        %175 = sbr.rel (%p173) target = $region16
      $region15: #{linear_classifier_forward.1} parent=11 // pred_region
        _
      $region16: #{linear_classifier_forward.1} parent=11 // pred_fallthru
        _
      // Predicated region
      $region17: #{linear_classifier_forward.1} parent=11 // pred_check
        %p176 = pneg %p80
      $region18: #{linear_classifier_forward.1} parent=11 // pred_check_branch
        %178 = sbr.rel (%p176) target = $region20
      $region19: #{linear_classifier_forward.1} parent=11 // pred_region
        _
      $region20: #{linear_classifier_forward.1} parent=11 // pred_fallthru
        _
    $region12: #{linear_classifier_forward.1} parent=5 // pred_fallthru
      _
    %p179 = scmp.lt.s32.totalorder %s12, 3
    // Predicated region
    $region21: #{linear_classifier_forward.1} parent=5 // pred_check
      %p180 = pneg %p179
    $region22: #{linear_classifier_forward.1} parent=5 // pred_check_branch
      %182 = sbr.rel (%p180) target = $region24
    $region23: #{linear_classifier_forward.1} parent=5 // pred_region
      // Predicated region
      $region25: #{linear_classifier_forward.1} parent=23 // pred_check
        %p183 = pneg %p32
      $region26: #{linear_classifier_forward.1} parent=23 // pred_check_branch
        %185 = sbr.rel (%p183) target = $region28
      $region27: #{linear_classifier_forward.1} parent=23 // pred_region
        %p186 = scmp.lt.s32.totalorder %s12, 2
        %s187 = scalar_select %p186, %s12, 2
        %s188 = smul.addr %s187, 8
        %s189 = scalar_lea.vmem %s0, %s188
      $region28: #{linear_classifier_forward.1} parent=23 // pred_fallthru
        _
      // Predicated region
      $region29: #{linear_classifier_forward.1} parent=23 // pred_check
        %p190 = pneg %p100
      $region30: #{linear_classifier_forward.1} parent=23 // pred_check_branch
        %192 = sbr.rel (%p190) target = $region32
      $region31: #{linear_classifier_forward.1} parent=23 // pred_region
        %p193 = scmp.lt.s32.totalorder %s12, 2
        %s194 = scalar_select %p193, %s12, 2
        %s195 = smul.addr %s194, 8
        %s196 = scalar_lea.vmem %s3, %s195
      $region32: #{linear_classifier_forward.1} parent=23 // pred_fallthru
        _
    $region24: #{linear_classifier_forward.1} parent=5 // pred_fallthru
      _
    %p197 = scmp.le.s32.totalorder 1, %s12
    %p198 = scmp.lt.s32.totalorder %s12, 4
    %p199 = pnand %p197, %p198
    %p200 = pneg %p199
    // Predicated region
    $region33: #{linear_classifier_forward.1} parent=5 // pred_check
      _
    $region34: #{linear_classifier_forward.1} parent=5 // pred_check_branch
      %202 = sbr.rel (%p199) target = $region36
    $region35: #{linear_classifier_forward.1} parent=5 // pred_region
      %s203 = ssub.s32 %s12, 1
      %p204 = scmp.lt.s32.totalorder %s17, 2
      %s205 = scalar_select %p204, %s17, 2
      %s206 = smul.addr %s205, 8
      %s207 = scalar_lea.vmem %s0, %s206
      %p208 = pneg %p38
      %p209 = pneg %p35
      %p210 = pneg %p59
      %p211 = pneg %p56
      %p212 = pneg %p80
      %p213 = pneg %p77
      %p214 = scmp.lt.s32.totalorder %s17, 2
      %s215 = scalar_select %p214, %s17, 2
      %s216 = smul.addr %s215, 8
      %s217 = scalar_lea.vmem %s3, %s216
      %p218 = pneg %p106
      %p219 = pneg %p103
      %p220 = pneg %p132
      %p221 = pneg %p129
      %p222 = scmp.lt.s32.totalorder %s17, 2
      %s223 = scalar_select %p222, %s17, 2
      %s224 = smul.addr %s223, 8
      %s225 = scalar_lea.vmem %s4, %s224
      %p226 = pneg %p158
      %p227 = pneg %p155
      %p228 = scmp.lt.s32.totalorder %s17, 2
      %s229 = scalar_select %p228, %s17, 2
      %s230 = smul.addr %s229, 8
      %s231 = scalar_lea.vmem %s5, %s230
      %p232 = scmp.lt.s32.totalorder %s17, 2
      %s233 = scalar_select %p232, %s17, 2
      %s234 = smul.addr %s233, 8
      %s235 = scalar_lea.vmem %s0, %s234
      %p236 = scmp.lt.s32.totalorder %s17, 2
      %s237 = scalar_select %p236, %s17, 2
      %s238 = smul.addr %s237, 8
      %s239 = scalar_lea.vmem %s3, %s238
      %p240 = scmp.lt.s32.totalorder %s17, 2
      %s241 = scalar_select %p240, %s17, 2
      %s242 = smul.addr %s241, 8
      %s243 = scalar_lea.vmem %s4, %s242
      %p244 = scmp.lt.s32.totalorder %s17, 2
      %s245 = scalar_select %p244, %s17, 2
      %s246 = smul.addr %s245, 8
      %s247 = scalar_lea.vmem %s5, %s246
      %v248 = vld [vmem:[%s235] sm:$0xff]
      %v249 = vld [vmem:[%s1] sm:$0xff]
      %v250 = vld [vmem:[%s1 + $0x8] sm:$0xff]
      %v251 = vld [vmem:[%s1 + $0x10] sm:$0xff]
      %v252 = vld [vmem:[%s1 + $0x18] sm:$0xff]
      %v253 = vld [vmem:[%s1 + $0x20] sm:$0xff]
      %v254 = vld [vmem:[%s1 + $0x28] sm:$0xff]
      %v255 = vld [vmem:[%s1 + $0x30] sm:$0xff]
      %v256 = vld [vmem:[%s1 + $0x38] sm:$0xff]
      %v257 = vld [vmem:[%s1 + $0x40] sm:$0xff]
      %v258 = vld [vmem:[%s1 + $0x48] sm:$0xff]
      %v259 = vld [vmem:[%s1 + $0x50] sm:$0xff]
      %v260 = vld [vmem:[%s1 + $0x58] sm:$0xff]
      %v261 = vld [vmem:[%s1 + $0x60] sm:$0xff]
      %v262 = vld [vmem:[%s1 + $0x68] sm:$0xff]
      %v263 = vld [vmem:[%s1 + $0x70] sm:$0xff]
      %v264 = vld [vmem:[%s1 + $0x78] sm:$0xff]
      %v265 = vld [vmem:[%s2] sm:$0x1]
      %v267 = vlaneseq
      %v268 = vshrl.u32 %v267, 7
      %v269 = vsub.s32 0, %v268
      %v270 = vrot.slane %v265, %v269
      %272 = vmatprep.subr.mxu0 0.0
      %273 = vmatpush1.msra.mxu0 %v264
      %274 = vmatprep.subr.mxu0 0.0
      %275 = vmatpush1.msra.mxu0 %v263
      %276 = vmatprep.subr.mxu0 0.0
      %277 = vmatpush1.msra.mxu0 %v262
      %278 = vmatprep.subr.mxu0 0.0
      %279 = vmatpush1.msra.mxu0 %v261
      %280 = vmatprep.subr.mxu0 0.0
      %281 = vmatpush1.msra.mxu0 %v260
      %282 = vmatprep.subr.mxu0 0.0
      %283 = vmatpush1.msra.mxu0 %v259
      %284 = vmatprep.subr.mxu0 0.0
      %285 = vmatpush1.msra.mxu0 %v258
      %286 = vmatprep.subr.mxu0 0.0
      %287 = vmatpush1.msra.mxu0 %v257
      %288 = vmatprep.subr.mxu0 0.0
      %289 = vmatpush1.msra.mxu0 %v256
      %290 = vmatprep.subr.mxu0 0.0
      %291 = vmatpush1.msra.mxu0 %v255
      %292 = vmatprep.subr.mxu0 0.0
      %293 = vmatpush1.msra.mxu0 %v254
      %294 = vmatprep.subr.mxu0 0.0
      %295 = vmatpush1.msra.mxu0 %v253
      %296 = vmatprep.subr.mxu0 0.0
      %297 = vmatpush1.msra.mxu0 %v252
      %298 = vmatprep.subr.mxu0 0.0
      %299 = vmatpush1.msra.mxu0 %v251
      %300 = vmatprep.subr.mxu0 0.0
      %301 = vmatpush1.msra.mxu0 %v250
      %302 = vmatprep.subr.mxu0 0.0
      %303 = vmatpush1.msra.mxu0 %v249
      %304 = vmatprep.subr.mxu0 0.0
      %305 = vmatpush2.msra.mxu0 0.0
      %306 = vmatprep.subr.mxu0 0.0
      %307 = vmatpush2.msra.mxu0 0.0
      %308 = vmatprep.subr.mxu0 0.0
      %309 = vmatpush2.msra.mxu0 0.0
      %310 = vmatprep.subr.mxu0 0.0
      %311 = vmatpush2.msra.mxu0 0.0
      %312 = vmatprep.subr.mxu0 0.0
      %313 = vmatpush2.msra.mxu0 0.0
      %314 = vmatprep.subr.mxu0 0.0
      %315 = vmatpush2.msra.mxu0 0.0
      %316 = vmatprep.subr.mxu0 0.0
      %317 = vmatpush2.msra.mxu0 0.0
      %318 = vmatprep.subr.mxu0 0.0
      %319 = vmatpush2.msra.mxu0 0.0
      %320 = vmatprep.subr.mxu0 0.0
      %321 = vmatpush2.msra.mxu0 0.0
      %322 = vmatprep.subr.mxu0 0.0
      %323 = vmatpush2.msra.mxu0 0.0
      %324 = vmatprep.subr.mxu0 0.0
      %325 = vmatpush2.msra.mxu0 0.0
      %326 = vmatprep.subr.mxu0 0.0
      %327 = vmatpush2.msra.mxu0 0.0
      %328 = vmatprep.subr.mxu0 0.0
      %329 = vmatpush2.msra.mxu0 0.0
      %330 = vmatprep.subr.mxu0 0.0
      %331 = vmatpush2.msra.mxu0 0.0
      %332 = vmatprep.subr.mxu0 0.0
      %333 = vmatpush2.msra.mxu0 0.0
      %334 = vmatprep.subr.mxu0 0.0
      %335 = vmatpush2.msra.mxu0 0.0
      %336 = vmatprep.mubr.f32.mxu0 0.0
      %337 = vmatmul.mubr.f32.gmra.mxu0 %v248
      %v338 = vpop.f32.mrf.mxu0
      %v339 = vadd.f32 %v270, %v338
      %v340 = vpop.f32.mrf.mxu0
      %341 = vdwg.mxu0
      %342 = vst [vmem:[%s243] sm:$0xff] %v339
      %343 = vmax.xlane.f32.xlu0 %v339
      %v344 = vpop.xlane.xlu0 %343
      %v345 = vsub.f32 %v339, %v344
      %v346 = vmul.f32 %v345, 1.442695
      %v347 = vpow.pop %v346
      %348 = vadd.xlane.f32.xlu0 %v347
      %v349 = vpop.xlane.xlu0 %348
      %v350 = vlog2.pop %v349
      %v351 = vmul.f32 %v350, 0.6931472
      %v352 = vadd.f32 %v344, %v351
      %v353 = vld [vmem:[%s239] sm:$0xff]
      %v354 = vlaneseq
      %v355 = vand.u32 %v354, 127
      %356 = vset.pattern.permute.xlu0 0
      %357 = vperm.xlu0 %356, %v353
      %v358 = vpop.permute.xlu0 %357
      %vm359 = vcmp.eq.s32.totalorder %v358, %v355
      %v360 = vsel %vm359, 1, 0
      %v361 = vcvt.s32.f32 %v360
      %v362 = vmul.f32 %v339, %v361
      %363 = vadd.xlane.f32.xlu0 %v362
      %v364 = vpop.xlane.xlu0 %363
      %v365 = vsub.f32 %v352, %v364
      %s366 = smul.u32 %s17, 8
      %v367 = vlaneseq
      %v368 = vshrl.u32 %v367, 7
      %v369 = vstv %s366
      %v370 = vadd.s32 %v369, %v368
      %vm371 = vcmp.lt.s32.totalorder %v370, 18
      %v372 = vsel %vm371, %v365, 0.0
      %vm373 = vcmask 7168
      %374 = vst.msk [vmem:[%s247] sm:$0xff] %vm373, %v372
      %p375 = scmp.lt.s32.totalorder %s17, 2
      %s376 = scalar_select %p375, %s17, 2
      %s377 = smul.addr %s376, 8
      %s378 = scalar_lea.vmem %s4, %s377
      %p379 = scmp.lt.s32.totalorder %s17, 2
      %s380 = scalar_select %p379, %s17, 2
      %s381 = smul.addr %s380, 8
      %s382 = scalar_lea.vmem %s5, %s381
      // Predicated region
      $region37: #{linear_classifier_forward.1} parent=35 // pred_check
        %p383 = pneg %p129
      $region38: #{linear_classifier_forward.1} parent=35 // pred_check_branch
        %385 = sbr.rel (%p383) target = $region40
      $region39: #{linear_classifier_forward.1} parent=35 // pred_region
        _
      $region40: #{linear_classifier_forward.1} parent=35 // pred_fallthru
        _
      // Predicated region
      $region41: #{linear_classifier_forward.1} parent=35 // pred_check
        %p386 = pneg %p155
      $region42: #{linear_classifier_forward.1} parent=35 // pred_check_branch
        %388 = sbr.rel (%p386) target = $region44
      $region43: #{linear_classifier_forward.1} parent=35 // pred_region
        _
      $region44: #{linear_classifier_forward.1} parent=35 // pred_fallthru
        _
    $region36: #{linear_classifier_forward.1} parent=5 // pred_fallthru
      _
    %p389 = scmp.le.s32.totalorder 2, %s12
    // Predicated region
    $region45: #{linear_classifier_forward.1} parent=5 // pred_check
      %p390 = pneg %p389
    $region46: #{linear_classifier_forward.1} parent=5 // pred_check_branch
      %392 = sbr.rel (%p390) target = $region48
    $region47: #{linear_classifier_forward.1} parent=5 // pred_region
      %s393 = ssub.s32 %s12, 2
      // Predicated region
      $region49: #{linear_classifier_forward.1} parent=47 // pred_check
        %p394 = pneg %p135
      $region50: #{linear_classifier_forward.1} parent=47 // pred_check_branch
        %396 = sbr.rel (%p394) target = $region52
      $region51: #{linear_classifier_forward.1} parent=47 // pred_region
        %p397 = scmp.lt.s32.totalorder %s18, 2
        %s398 = scalar_select %p397, %s18, 2
        %s399 = smul.addr %s398, 8
        %s400 = scalar_lea.vmem %s4, %s399
      $region52: #{linear_classifier_forward.1} parent=47 // pred_fallthru
        _
      // Predicated region
      $region53: #{linear_classifier_forward.1} parent=47 // pred_check
        %p401 = pneg %p161
      $region54: #{linear_classifier_forward.1} parent=47 // pred_check_branch
        %403 = sbr.rel (%p401) target = $region56
      $region55: #{linear_classifier_forward.1} parent=47 // pred_region
        %p404 = scmp.lt.s32.totalorder %s18, 2
        %s405 = scalar_select %p404, %s18, 2
        %s406 = smul.addr %s405, 8
        %s407 = scalar_lea.vmem %s5, %s406
      $region56: #{linear_classifier_forward.1} parent=47 // pred_fallthru
        _
    $region48: #{linear_classifier_forward.1} parent=5 // pred_fallthru
      _
  $region6: #{linear_classifier_forward.1} parent=0 // loop_footer
    %s16 = sadd.s32 1, %s12
  $region7: #{linear_classifier_forward.1} parent=0 // loop_footer_branch
    %11 = sbr.rel target = $region3
  $region8: #{linear_classifier_forward.1} parent=0 // loop_exit
    _

</llo_original>
